<compile_context>
chip_gen: v5e
topology: v5e:2x2
jax: 0.10.0
libtpu: 0.0.40
codegen_flags: <defaults>
</compile_context>

<pallas_src>
import functools

import jax
import jax.numpy as jnp
from jax.experimental import pallas as pl
from jax.experimental.pallas import tpu as pltpu


# ----------------------------- Pallas kernel --------------------------------

def _fused_attention_kernel(x_ref, wqkv_ref, bqkv_ref, wproj_ref, bproj_ref,
                            o_ref, *, num_heads, scale):
    # One batch element per grid point.
    # x_ref: (N, C); wqkv_ref: (C, 3C); bqkv_ref: (1, 3C);
    # wproj_ref: (C, C); bproj_ref: (1, C); o_ref: (N, C)
    N, C = x_ref.shape
    D = C // num_heads

    x = x_ref[...].astype(jnp.float32)

    # qkv projection: (N, C) @ (C, 3C) -> (N, 3C)
    qkv = jnp.dot(x, wqkv_ref[...].astype(jnp.float32),
                  preferred_element_type=jnp.float32)
    qkv = qkv + bqkv_ref[...].astype(jnp.float32)

    q = qkv[:, :C]
    k = qkv[:, C:2 * C]
    v = qkv[:, 2 * C:]

    # Per-head scaled-dot-product attention, statically unrolled over heads
    # (head_dim is tiny, so small per-head matmuls; everything stays in VMEM).
    head_outs = []
    for h in range(num_heads):
        sl = slice(h * D, (h + 1) * D)
        qh = q[:, sl]                                               # (N, D)
        kh = k[:, sl]                                               # (N, D)
        vh = v[:, sl]                                               # (N, D)
        s = jnp.dot(qh, kh.T, preferred_element_type=jnp.float32) * scale  # (N, N)
        s = s - jnp.max(s, axis=-1, keepdims=True)
        p = jnp.exp(s)
        p = p * pl.reciprocal(jnp.sum(p, axis=-1, keepdims=True), approx=False)
        head_outs.append(jnp.dot(p, vh, preferred_element_type=jnp.float32))
    o = jnp.concatenate(head_outs, axis=-1)                         # (N, C)

    # output projection + bias
    out = jnp.dot(o, wproj_ref[...].astype(jnp.float32),
                  preferred_element_type=jnp.float32)
    out = out + bproj_ref[...].astype(jnp.float32)
    o_ref[...] = out.astype(o_ref.dtype)


# ----------------------------- wrapper ---------------------------------------

def attention_forward(params, x, num_heads=8, qk_scale=None):
    """Matches PyTorch Attention.forward for x of shape (B, N, C)."""
    B, N, C = x.shape
    head_dim = C // num_heads
    scale = qk_scale if qk_scale is not None else head_dim ** -0.5

    qkv_b = params.get("qkv_b")
    if qkv_b is None:
        qkv_b = jnp.zeros((3 * C,), x.dtype)   # qkv_bias=False -> zero bias

    kernel = functools.partial(_fused_attention_kernel,
                               num_heads=num_heads, scale=scale)

    # TODO(synk): for large N the fused kernel should switch to a flash-style
    # q-tiled / online-softmax variant; current fusion assumes (N, C) fits VMEM.
    return pl.pallas_call(
        kernel,
        out_shape=jax.ShapeDtypeStruct((B, N, C), x.dtype),
        grid=(B,),
        in_specs=[
            pl.BlockSpec((None, N, C), lambda b: (b, 0, 0)),       # x, per-batch
            pl.BlockSpec((C, 3 * C), lambda b: (0, 0)),            # qkv weight (resident)
            pl.BlockSpec((1, 3 * C), lambda b: (0, 0)),            # qkv bias
            pl.BlockSpec((C, C), lambda b: (0, 0)),                # proj weight (resident)
            pl.BlockSpec((1, C), lambda b: (0, 0)),                # proj bias
        ],
        out_specs=pl.BlockSpec((None, N, C), lambda b: (b, 0, 0)),
        compiler_params=pltpu.CompilerParams(
            dimension_semantics=("parallel",)),
    )(x, params["qkv_w"], qkv_b.reshape(1, 3 * C),
      params["proj_w"], params["proj_b"].reshape(1, C))


def init_attention_params(key, dim, num_heads=8, qkv_bias=False):
    k1, k2, k3 = jax.random.split(key, 3)
    std = dim ** -0.5
    params = {
        # stored pre-transposed: y = x @ W  (W: (in, out))
        "qkv_w": jax.random.normal(k1, (dim, 3 * dim), jnp.float32) * std,
        "proj_w": jax.random.normal(k2, (dim, dim), jnp.float32) * std,
        "proj_b": jax.random.normal(k3, (dim,), jnp.float32) * 0.02,
    }
    if qkv_bias:
        params["qkv_b"] = jnp.zeros((3 * dim,), jnp.float32)
    return params


# ----------------------------- reference (pure JAX) --------------------------

def attention_reference(params, x, num_heads=8, qk_scale=None):
    B, N, C = x.shape
    head_dim = C // num_heads
    scale = qk_scale if qk_scale is not None else head_dim ** -0.5
    qkv = x.reshape(B * N, C) @ params["qkv_w"]
    if "qkv_b" in params:
        qkv = qkv + params["qkv_b"]
    qkv = qkv.reshape(B, N, 3, num_heads, head_dim).transpose(2, 0, 3, 1, 4)
    q, k, v = qkv[0], qkv[1], qkv[2]
    attn = jnp.einsum("bhnd,bhmd->bhnm", q, k) * scale
    attn = jax.nn.softmax(attn, axis=-1)
    o = jnp.einsum("bhnm,bhmd->bhnd", attn, v)
    o = o.transpose(0, 2, 1, 3).reshape(B * N, C)
    out = o @ params["proj_w"] + params["proj_b"]
    return out.reshape(B, N, C)


# ----------------------------- main ------------------------------------------

if __name__ == "__main__":
    B, N, C = 2, 8, 32     # batch, seq, dim  (num_heads=8 -> head_dim=4)
    num_heads = 8

    key = jax.random.PRNGKey(0)
    kx, kp = jax.random.split(key)
    x = jax.random.normal(kx, (B, N, C), jnp.float32)
    params = init_attention_params(kp, C, num_heads=num_heads, qkv_bias=False)

    out = attention_forward(params, x, num_heads=num_heads)
    out = jax.block_until_ready(out)

    ref = attention_reference(params, x, num_heads=num_heads)
    assert out.shape == (B, N, C)
    assert jnp.allclose(out, ref, atol=1e-4, rtol=1e-4), "mismatch vs JAX reference"

    print("KERNEL_OK")
</pallas_src>

<mosaic_0001>
module attributes {stable_mosaic.version = 11 : i64} {
  func.func @_fused_attention_kernel(%arg0: i32, %arg1: memref<1x8x32xf32, #tpu.memory_space<vmem>>, %arg2: memref<32x96xf32, #tpu.memory_space<vmem>>, %arg3: memref<1x96xf32, #tpu.memory_space<vmem>>, %arg4: memref<32x32xf32, #tpu.memory_space<vmem>>, %arg5: memref<1x32xf32, #tpu.memory_space<vmem>>, %arg6: memref<1x8x32xf32, #tpu.memory_space<vmem>>) attributes {dimension_semantics = [#tpu.dimension_semantics<parallel>], iteration_bounds = array<i64: 2>, scalar_prefetch = 0 : i64, scratch_operands = 0 : i64, tpu.core_type = #tpu.core_type<tc>, window_params = [{transform_indices = @transform_0, window_bounds = array<i64: 1, 8, 32>}, {pipeline_mode = #tpu.pipeline_mode<synchronous>, transform_indices = @transform_1, window_bounds = array<i64: 32, 96>}, {pipeline_mode = #tpu.pipeline_mode<synchronous>, transform_indices = @transform_2, window_bounds = array<i64: 1, 96>}, {pipeline_mode = #tpu.pipeline_mode<synchronous>, transform_indices = @transform_3, window_bounds = array<i64: 32, 32>}, {pipeline_mode = #tpu.pipeline_mode<synchronous>, transform_indices = @transform_4, window_bounds = array<i64: 1, 32>}, {transform_indices = @transform_5, window_bounds = array<i64: 1, 8, 32>}]} {
    %c0 = arith.constant 0 : index
    %c0_0 = arith.constant 0 : index
    %c0_1 = arith.constant 0 : index
    %0 = vector.load %arg1[%c0, %c0_0, %c0_1] : memref<1x8x32xf32, #tpu.memory_space<vmem>>, vector<1x8x32xf32>
    %1 = vector.shape_cast %0 : vector<1x8x32xf32> to vector<8x32xf32>
    %c0_2 = arith.constant 0 : index
    %c0_3 = arith.constant 0 : index
    %2 = vector.load %arg2[%c0_2, %c0_3] : memref<32x96xf32, #tpu.memory_space<vmem>>, vector<32x96xf32>
    %cst = arith.constant dense<0.000000e+00> : vector<8x96xf32>
    %3 = tpu.matmul %1, %2, %cst {dimension_numbers = #tpu.dot_dimension_numbers<[1], [0], [0], [1], [0, 0, 1, 1], [], []>} : vector<8x32xf32>, vector<32x96xf32>, vector<8x96xf32> -> vector<8x96xf32>
    %c0_4 = arith.constant 0 : index
    %c0_5 = arith.constant 0 : index
    %4 = vector.load %arg3[%c0_4, %c0_5] : memref<1x96xf32, #tpu.memory_space<vmem>>, vector<1x96xf32>
    %5 = vector.broadcast %4 : vector<1x96xf32> to vector<8x96xf32>
    %6 = arith.addf %3, %5 : vector<8x96xf32>
    %7 = vector.extract_strided_slice %6 {offsets = [0, 0], sizes = [8, 32], strides = [1, 1]} : vector<8x96xf32> to vector<8x32xf32>
    %8 = vector.extract_strided_slice %6 {offsets = [0, 32], sizes = [8, 32], strides = [1, 1]} : vector<8x96xf32> to vector<8x32xf32>
    %9 = vector.extract_strided_slice %6 {offsets = [0, 64], sizes = [8, 32], strides = [1, 1]} : vector<8x96xf32> to vector<8x32xf32>
    %10 = vector.extract_strided_slice %7 {offsets = [0, 0], sizes = [8, 4], strides = [1, 1]} : vector<8x32xf32> to vector<8x4xf32>
    %11 = vector.extract_strided_slice %8 {offsets = [0, 0], sizes = [8, 4], strides = [1, 1]} : vector<8x32xf32> to vector<8x4xf32>
    %12 = vector.extract_strided_slice %9 {offsets = [0, 0], sizes = [8, 4], strides = [1, 1]} : vector<8x32xf32> to vector<8x4xf32>
    %13 = tpu.transpose %11, [1, 0] : vector<8x4xf32> -> vector<4x8xf32>
    %cst_6 = arith.constant dense<0.000000e+00> : vector<8x8xf32>
    %14 = tpu.matmul %10, %13, %cst_6 {dimension_numbers = #tpu.dot_dimension_numbers<[1], [0], [0], [1], [0, 0, 1, 1], [], []>} : vector<8x4xf32>, vector<4x8xf32>, vector<8x8xf32> -> vector<8x8xf32>
    %cst_7 = arith.constant 5.000000e-01 : f32
    %15 = vector.broadcast %cst_7 : f32 to vector<8x8xf32>
    %16 = arith.mulf %14, %15 : vector<8x8xf32>
    %cst_8 = arith.constant dense<0xFF800000> : vector<8xf32>
    %17 = vector.multi_reduction <maximumf>, %16, %cst_8 [1] : vector<8x8xf32> to vector<8xf32>
    %18 = vector.shape_cast %17 : vector<8xf32> to vector<8x1xf32>
    %19 = vector.broadcast %18 : vector<8x1xf32> to vector<8x8xf32>
    %20 = arith.subf %16, %19 : vector<8x8xf32>
    %21 = math.exp %20 : vector<8x8xf32>
    %cst_9 = arith.constant dense<0.000000e+00> : vector<8xf32>
    %22 = vector.multi_reduction <add>, %21, %cst_9 [1] : vector<8x8xf32> to vector<8xf32>
    %23 = vector.shape_cast %22 : vector<8xf32> to vector<8x1xf32>
    %24 = tpu.reciprocal %23 : vector<8x1xf32> -> vector<8x1xf32>
    %25 = vector.broadcast %24 : vector<8x1xf32> to vector<8x8xf32>
    %26 = arith.mulf %21, %25 : vector<8x8xf32>
    %cst_10 = arith.constant dense<0.000000e+00> : vector<8x4xf32>
    %27 = tpu.matmul %26, %12, %cst_10 {dimension_numbers = #tpu.dot_dimension_numbers<[1], [0], [0], [1], [0, 0, 1, 1], [], []>} : vector<8x8xf32>, vector<8x4xf32>, vector<8x4xf32> -> vector<8x4xf32>
    %28 = vector.extract_strided_slice %7 {offsets = [0, 4], sizes = [8, 4], strides = [1, 1]} : vector<8x32xf32> to vector<8x4xf32>
    %29 = vector.extract_strided_slice %8 {offsets = [0, 4], sizes = [8, 4], strides = [1, 1]} : vector<8x32xf32> to vector<8x4xf32>
    %30 = vector.extract_strided_slice %9 {offsets = [0, 4], sizes = [8, 4], strides = [1, 1]} : vector<8x32xf32> to vector<8x4xf32>
    %31 = tpu.transpose %29, [1, 0] : vector<8x4xf32> -> vector<4x8xf32>
    %cst_11 = arith.constant dense<0.000000e+00> : vector<8x8xf32>
    %32 = tpu.matmul %28, %31, %cst_11 {dimension_numbers = #tpu.dot_dimension_numbers<[1], [0], [0], [1], [0, 0, 1, 1], [], []>} : vector<8x4xf32>, vector<4x8xf32>, vector<8x8xf32> -> vector<8x8xf32>
    %cst_12 = arith.constant 5.000000e-01 : f32
    %33 = vector.broadcast %cst_12 : f32 to vector<8x8xf32>
    %34 = arith.mulf %32, %33 : vector<8x8xf32>
    %cst_13 = arith.constant dense<0xFF800000> : vector<8xf32>
    %35 = vector.multi_reduction <maximumf>, %34, %cst_13 [1] : vector<8x8xf32> to vector<8xf32>
    %36 = vector.shape_cast %35 : vector<8xf32> to vector<8x1xf32>
    %37 = vector.broadcast %36 : vector<8x1xf32> to vector<8x8xf32>
    %38 = arith.subf %34, %37 : vector<8x8xf32>
    %39 = math.exp %38 : vector<8x8xf32>
    %cst_14 = arith.constant dense<0.000000e+00> : vector<8xf32>
    %40 = vector.multi_reduction <add>, %39, %cst_14 [1] : vector<8x8xf32> to vector<8xf32>
    %41 = vector.shape_cast %40 : vector<8xf32> to vector<8x1xf32>
    %42 = tpu.reciprocal %41 : vector<8x1xf32> -> vector<8x1xf32>
    %43 = vector.broadcast %42 : vector<8x1xf32> to vector<8x8xf32>
    %44 = arith.mulf %39, %43 : vector<8x8xf32>
    %cst_15 = arith.constant dense<0.000000e+00> : vector<8x4xf32>
    %45 = tpu.matmul %44, %30, %cst_15 {dimension_numbers = #tpu.dot_dimension_numbers<[1], [0], [0], [1], [0, 0, 1, 1], [], []>} : vector<8x8xf32>, vector<8x4xf32>, vector<8x4xf32> -> vector<8x4xf32>
    %46 = vector.extract_strided_slice %7 {offsets = [0, 8], sizes = [8, 4], strides = [1, 1]} : vector<8x32xf32> to vector<8x4xf32>
    %47 = vector.extract_strided_slice %8 {offsets = [0, 8], sizes = [8, 4], strides = [1, 1]} : vector<8x32xf32> to vector<8x4xf32>
    %48 = vector.extract_strided_slice %9 {offsets = [0, 8], sizes = [8, 4], strides = [1, 1]} : vector<8x32xf32> to vector<8x4xf32>
    %49 = tpu.transpose %47, [1, 0] : vector<8x4xf32> -> vector<4x8xf32>
    %cst_16 = arith.constant dense<0.000000e+00> : vector<8x8xf32>
    %50 = tpu.matmul %46, %49, %cst_16 {dimension_numbers = #tpu.dot_dimension_numbers<[1], [0], [0], [1], [0, 0, 1, 1], [], []>} : vector<8x4xf32>, vector<4x8xf32>, vector<8x8xf32> -> vector<8x8xf32>
    %cst_17 = arith.constant 5.000000e-01 : f32
    %51 = vector.broadcast %cst_17 : f32 to vector<8x8xf32>
    %52 = arith.mulf %50, %51 : vector<8x8xf32>
    %cst_18 = arith.constant dense<0xFF800000> : vector<8xf32>
    %53 = vector.multi_reduction <maximumf>, %52, %cst_18 [1] : vector<8x8xf32> to vector<8xf32>
    %54 = vector.shape_cast %53 : vector<8xf32> to vector<8x1xf32>
    %55 = vector.broadcast %54 : vector<8x1xf32> to vector<8x8xf32>
    %56 = arith.subf %52, %55 : vector<8x8xf32>
    %57 = math.exp %56 : vector<8x8xf32>
    %cst_19 = arith.constant dense<0.000000e+00> : vector<8xf32>
    %58 = vector.multi_reduction <add>, %57, %cst_19 [1] : vector<8x8xf32> to vector<8xf32>
    %59 = vector.shape_cast %58 : vector<8xf32> to vector<8x1xf32>
    %60 = tpu.reciprocal %59 : vector<8x1xf32> -> vector<8x1xf32>
    %61 = vector.broadcast %60 : vector<8x1xf32> to vector<8x8xf32>
    %62 = arith.mulf %57, %61 : vector<8x8xf32>
    %cst_20 = arith.constant dense<0.000000e+00> : vector<8x4xf32>
    %63 = tpu.matmul %62, %48, %cst_20 {dimension_numbers = #tpu.dot_dimension_numbers<[1], [0], [0], [1], [0, 0, 1, 1], [], []>} : vector<8x8xf32>, vector<8x4xf32>, vector<8x4xf32> -> vector<8x4xf32>
    %64 = vector.extract_strided_slice %7 {offsets = [0, 12], sizes = [8, 4], strides = [1, 1]} : vector<8x32xf32> to vector<8x4xf32>
    %65 = vector.extract_strided_slice %8 {offsets = [0, 12], sizes = [8, 4], strides = [1, 1]} : vector<8x32xf32> to vector<8x4xf32>
    %66 = vector.extract_strided_slice %9 {offsets = [0, 12], sizes = [8, 4], strides = [1, 1]} : vector<8x32xf32> to vector<8x4xf32>
    %67 = tpu.transpose %65, [1, 0] : vector<8x4xf32> -> vector<4x8xf32>
    %cst_21 = arith.constant dense<0.000000e+00> : vector<8x8xf32>
    %68 = tpu.matmul %64, %67, %cst_21 {dimension_numbers = #tpu.dot_dimension_numbers<[1], [0], [0], [1], [0, 0, 1, 1], [], []>} : vector<8x4xf32>, vector<4x8xf32>, vector<8x8xf32> -> vector<8x8xf32>
    %cst_22 = arith.constant 5.000000e-01 : f32
    %69 = vector.broadcast %cst_22 : f32 to vector<8x8xf32>
    %70 = arith.mulf %68, %69 : vector<8x8xf32>
    %cst_23 = arith.constant dense<0xFF800000> : vector<8xf32>
    %71 = vector.multi_reduction <maximumf>, %70, %cst_23 [1] : vector<8x8xf32> to vector<8xf32>
    %72 = vector.shape_cast %71 : vector<8xf32> to vector<8x1xf32>
    %73 = vector.broadcast %72 : vector<8x1xf32> to vector<8x8xf32>
    %74 = arith.subf %70, %73 : vector<8x8xf32>
    %75 = math.exp %74 : vector<8x8xf32>
    %cst_24 = arith.constant dense<0.000000e+00> : vector<8xf32>
    %76 = vector.multi_reduction <add>, %75, %cst_24 [1] : vector<8x8xf32> to vector<8xf32>
    %77 = vector.shape_cast %76 : vector<8xf32> to vector<8x1xf32>
    %78 = tpu.reciprocal %77 : vector<8x1xf32> -> vector<8x1xf32>
    %79 = vector.broadcast %78 : vector<8x1xf32> to vector<8x8xf32>
    %80 = arith.mulf %75, %79 : vector<8x8xf32>
    %cst_25 = arith.constant dense<0.000000e+00> : vector<8x4xf32>
    %81 = tpu.matmul %80, %66, %cst_25 {dimension_numbers = #tpu.dot_dimension_numbers<[1], [0], [0], [1], [0, 0, 1, 1], [], []>} : vector<8x8xf32>, vector<8x4xf32>, vector<8x4xf32> -> vector<8x4xf32>
    %82 = vector.extract_strided_slice %7 {offsets = [0, 16], sizes = [8, 4], strides = [1, 1]} : vector<8x32xf32> to vector<8x4xf32>
    %83 = vector.extract_strided_slice %8 {offsets = [0, 16], sizes = [8, 4], strides = [1, 1]} : vector<8x32xf32> to vector<8x4xf32>
    %84 = vector.extract_strided_slice %9 {offsets = [0, 16], sizes = [8, 4], strides = [1, 1]} : vector<8x32xf32> to vector<8x4xf32>
    %85 = tpu.transpose %83, [1, 0] : vector<8x4xf32> -> vector<4x8xf32>
    %cst_26 = arith.constant dense<0.000000e+00> : vector<8x8xf32>
    %86 = tpu.matmul %82, %85, %cst_26 {dimension_numbers = #tpu.dot_dimension_numbers<[1], [0], [0], [1], [0, 0, 1, 1], [], []>} : vector<8x4xf32>, vector<4x8xf32>, vector<8x8xf32> -> vector<8x8xf32>
    %cst_27 = arith.constant 5.000000e-01 : f32
    %87 = vector.broadcast %cst_27 : f32 to vector<8x8xf32>
    %88 = arith.mulf %86, %87 : vector<8x8xf32>
    %cst_28 = arith.constant dense<0xFF800000> : vector<8xf32>
    %89 = vector.multi_reduction <maximumf>, %88, %cst_28 [1] : vector<8x8xf32> to vector<8xf32>
    %90 = vector.shape_cast %89 : vector<8xf32> to vector<8x1xf32>
    %91 = vector.broadcast %90 : vector<8x1xf32> to vector<8x8xf32>
    %92 = arith.subf %88, %91 : vector<8x8xf32>
    %93 = math.exp %92 : vector<8x8xf32>
    %cst_29 = arith.constant dense<0.000000e+00> : vector<8xf32>
    %94 = vector.multi_reduction <add>, %93, %cst_29 [1] : vector<8x8xf32> to vector<8xf32>
    %95 = vector.shape_cast %94 : vector<8xf32> to vector<8x1xf32>
    %96 = tpu.reciprocal %95 : vector<8x1xf32> -> vector<8x1xf32>
    %97 = vector.broadcast %96 : vector<8x1xf32> to vector<8x8xf32>
    %98 = arith.mulf %93, %97 : vector<8x8xf32>
    %cst_30 = arith.constant dense<0.000000e+00> : vector<8x4xf32>
    %99 = tpu.matmul %98, %84, %cst_30 {dimension_numbers = #tpu.dot_dimension_numbers<[1], [0], [0], [1], [0, 0, 1, 1], [], []>} : vector<8x8xf32>, vector<8x4xf32>, vector<8x4xf32> -> vector<8x4xf32>
    %100 = vector.extract_strided_slice %7 {offsets = [0, 20], sizes = [8, 4], strides = [1, 1]} : vector<8x32xf32> to vector<8x4xf32>
    %101 = vector.extract_strided_slice %8 {offsets = [0, 20], sizes = [8, 4], strides = [1, 1]} : vector<8x32xf32> to vector<8x4xf32>
    %102 = vector.extract_strided_slice %9 {offsets = [0, 20], sizes = [8, 4], strides = [1, 1]} : vector<8x32xf32> to vector<8x4xf32>
    %103 = tpu.transpose %101, [1, 0] : vector<8x4xf32> -> vector<4x8xf32>
    %cst_31 = arith.constant dense<0.000000e+00> : vector<8x8xf32>
    %104 = tpu.matmul %100, %103, %cst_31 {dimension_numbers = #tpu.dot_dimension_numbers<[1], [0], [0], [1], [0, 0, 1, 1], [], []>} : vector<8x4xf32>, vector<4x8xf32>, vector<8x8xf32> -> vector<8x8xf32>
    %cst_32 = arith.constant 5.000000e-01 : f32
    %105 = vector.broadcast %cst_32 : f32 to vector<8x8xf32>
    %106 = arith.mulf %104, %105 : vector<8x8xf32>
    %cst_33 = arith.constant dense<0xFF800000> : vector<8xf32>
    %107 = vector.multi_reduction <maximumf>, %106, %cst_33 [1] : vector<8x8xf32> to vector<8xf32>
    %108 = vector.shape_cast %107 : vector<8xf32> to vector<8x1xf32>
    %109 = vector.broadcast %108 : vector<8x1xf32> to vector<8x8xf32>
    %110 = arith.subf %106, %109 : vector<8x8xf32>
    %111 = math.exp %110 : vector<8x8xf32>
    %cst_34 = arith.constant dense<0.000000e+00> : vector<8xf32>
    %112 = vector.multi_reduction <add>, %111, %cst_34 [1] : vector<8x8xf32> to vector<8xf32>
    %113 = vector.shape_cast %112 : vector<8xf32> to vector<8x1xf32>
    %114 = tpu.reciprocal %113 : vector<8x1xf32> -> vector<8x1xf32>
    %115 = vector.broadcast %114 : vector<8x1xf32> to vector<8x8xf32>
    %116 = arith.mulf %111, %115 : vector<8x8xf32>
    %cst_35 = arith.constant dense<0.000000e+00> : vector<8x4xf32>
    %117 = tpu.matmul %116, %102, %cst_35 {dimension_numbers = #tpu.dot_dimension_numbers<[1], [0], [0], [1], [0, 0, 1, 1], [], []>} : vector<8x8xf32>, vector<8x4xf32>, vector<8x4xf32> -> vector<8x4xf32>
    %118 = vector.extract_strided_slice %7 {offsets = [0, 24], sizes = [8, 4], strides = [1, 1]} : vector<8x32xf32> to vector<8x4xf32>
    %119 = vector.extract_strided_slice %8 {offsets = [0, 24], sizes = [8, 4], strides = [1, 1]} : vector<8x32xf32> to vector<8x4xf32>
    %120 = vector.extract_strided_slice %9 {offsets = [0, 24], sizes = [8, 4], strides = [1, 1]} : vector<8x32xf32> to vector<8x4xf32>
    %121 = tpu.transpose %119, [1, 0] : vector<8x4xf32> -> vector<4x8xf32>
    %cst_36 = arith.constant dense<0.000000e+00> : vector<8x8xf32>
    %122 = tpu.matmul %118, %121, %cst_36 {dimension_numbers = #tpu.dot_dimension_numbers<[1], [0], [0], [1], [0, 0, 1, 1], [], []>} : vector<8x4xf32>, vector<4x8xf32>, vector<8x8xf32> -> vector<8x8xf32>
    %cst_37 = arith.constant 5.000000e-01 : f32
    %123 = vector.broadcast %cst_37 : f32 to vector<8x8xf32>
    %124 = arith.mulf %122, %123 : vector<8x8xf32>
    %cst_38 = arith.constant dense<0xFF800000> : vector<8xf32>
    %125 = vector.multi_reduction <maximumf>, %124, %cst_38 [1] : vector<8x8xf32> to vector<8xf32>
    %126 = vector.shape_cast %125 : vector<8xf32> to vector<8x1xf32>
    %127 = vector.broadcast %126 : vector<8x1xf32> to vector<8x8xf32>
    %128 = arith.subf %124, %127 : vector<8x8xf32>
    %129 = math.exp %128 : vector<8x8xf32>
    %cst_39 = arith.constant dense<0.000000e+00> : vector<8xf32>
    %130 = vector.multi_reduction <add>, %129, %cst_39 [1] : vector<8x8xf32> to vector<8xf32>
    %131 = vector.shape_cast %130 : vector<8xf32> to vector<8x1xf32>
    %132 = tpu.reciprocal %131 : vector<8x1xf32> -> vector<8x1xf32>
    %133 = vector.broadcast %132 : vector<8x1xf32> to vector<8x8xf32>
    %134 = arith.mulf %129, %133 : vector<8x8xf32>
    %cst_40 = arith.constant dense<0.000000e+00> : vector<8x4xf32>
    %135 = tpu.matmul %134, %120, %cst_40 {dimension_numbers = #tpu.dot_dimension_numbers<[1], [0], [0], [1], [0, 0, 1, 1], [], []>} : vector<8x8xf32>, vector<8x4xf32>, vector<8x4xf32> -> vector<8x4xf32>
    %136 = vector.extract_strided_slice %7 {offsets = [0, 28], sizes = [8, 4], strides = [1, 1]} : vector<8x32xf32> to vector<8x4xf32>
    %137 = vector.extract_strided_slice %8 {offsets = [0, 28], sizes = [8, 4], strides = [1, 1]} : vector<8x32xf32> to vector<8x4xf32>
    %138 = vector.extract_strided_slice %9 {offsets = [0, 28], sizes = [8, 4], strides = [1, 1]} : vector<8x32xf32> to vector<8x4xf32>
    %139 = tpu.transpose %137, [1, 0] : vector<8x4xf32> -> vector<4x8xf32>
    %cst_41 = arith.constant dense<0.000000e+00> : vector<8x8xf32>
    %140 = tpu.matmul %136, %139, %cst_41 {dimension_numbers = #tpu.dot_dimension_numbers<[1], [0], [0], [1], [0, 0, 1, 1], [], []>} : vector<8x4xf32>, vector<4x8xf32>, vector<8x8xf32> -> vector<8x8xf32>
    %cst_42 = arith.constant 5.000000e-01 : f32
    %141 = vector.broadcast %cst_42 : f32 to vector<8x8xf32>
    %142 = arith.mulf %140, %141 : vector<8x8xf32>
    %cst_43 = arith.constant dense<0xFF800000> : vector<8xf32>
    %143 = vector.multi_reduction <maximumf>, %142, %cst_43 [1] : vector<8x8xf32> to vector<8xf32>
    %144 = vector.shape_cast %143 : vector<8xf32> to vector<8x1xf32>
    %145 = vector.broadcast %144 : vector<8x1xf32> to vector<8x8xf32>
    %146 = arith.subf %142, %145 : vector<8x8xf32>
    %147 = math.exp %146 : vector<8x8xf32>
    %cst_44 = arith.constant dense<0.000000e+00> : vector<8xf32>
    %148 = vector.multi_reduction <add>, %147, %cst_44 [1] : vector<8x8xf32> to vector<8xf32>
    %149 = vector.shape_cast %148 : vector<8xf32> to vector<8x1xf32>
    %150 = tpu.reciprocal %149 : vector<8x1xf32> -> vector<8x1xf32>
    %151 = vector.broadcast %150 : vector<8x1xf32> to vector<8x8xf32>
    %152 = arith.mulf %147, %151 : vector<8x8xf32>
    %cst_45 = arith.constant dense<0.000000e+00> : vector<8x4xf32>
    %153 = tpu.matmul %152, %138, %cst_45 {dimension_numbers = #tpu.dot_dimension_numbers<[1], [0], [0], [1], [0, 0, 1, 1], [], []>} : vector<8x8xf32>, vector<8x4xf32>, vector<8x4xf32> -> vector<8x4xf32>
    %154 = tpu.concatenate %27, %45, %63, %81, %99, %117, %135, %153 in 1 : vector<8x4xf32>, vector<8x4xf32>, vector<8x4xf32>, vector<8x4xf32>, vector<8x4xf32>, vector<8x4xf32>, vector<8x4xf32>, vector<8x4xf32> -> vector<8x32xf32>
    %c0_46 = arith.constant 0 : index
    %c0_47 = arith.constant 0 : index
    %155 = vector.load %arg4[%c0_46, %c0_47] : memref<32x32xf32, #tpu.memory_space<vmem>>, vector<32x32xf32>
    %cst_48 = arith.constant dense<0.000000e+00> : vector<8x32xf32>
    %156 = tpu.matmul %154, %155, %cst_48 {dimension_numbers = #tpu.dot_dimension_numbers<[1], [0], [0], [1], [0, 0, 1, 1], [], []>} : vector<8x32xf32>, vector<32x32xf32>, vector<8x32xf32> -> vector<8x32xf32>
    %c0_49 = arith.constant 0 : index
    %c0_50 = arith.constant 0 : index
    %157 = vector.load %arg5[%c0_49, %c0_50] : memref<1x32xf32, #tpu.memory_space<vmem>>, vector<1x32xf32>
    %158 = vector.broadcast %157 : vector<1x32xf32> to vector<8x32xf32>
    %159 = arith.addf %156, %158 : vector<8x32xf32>
    %c0_51 = arith.constant 0 : index
    %c0_52 = arith.constant 0 : index
    %c0_53 = arith.constant 0 : index
    %160 = vector.load %arg6[%c0_51, %c0_52, %c0_53] : memref<1x8x32xf32, #tpu.memory_space<vmem>>, vector<1x8x32xf32>
    %161 = vector.shape_cast %160 : vector<1x8x32xf32> to vector<8x32xf32>
    %162 = vector.shape_cast %159 : vector<8x32xf32> to vector<1x8x32xf32>
    tpu.vector_store %arg6[%c0_51, %c0_52, %c0_53], %162 {strides = array<i32>} : memref<1x8x32xf32, #tpu.memory_space<vmem>>, vector<1x8x32xf32>,
    return
  }
  func.func @transform_0(%arg0: i32) -> (i32, i32, i32) {
    %c0_i32 = arith.constant 0 : i32
    %c0_i32_0 = arith.constant 0 : i32
    %c0_i32_1 = arith.constant 0 : i32
    return %arg0, %c0_i32, %c0_i32_0 : i32, i32, i32
  }
  func.func @transform_1(%arg0: i32) -> (i32, i32) {
    %c0_i32 = arith.constant 0 : i32
    %c0_i32_0 = arith.constant 0 : i32
    %c0_i32_1 = arith.constant 0 : i32
    return %c0_i32, %c0_i32_0 : i32, i32
  }
  func.func @transform_2(%arg0: i32) -> (i32, i32) {
    %c0_i32 = arith.constant 0 : i32
    %c0_i32_0 = arith.constant 0 : i32
    %c0_i32_1 = arith.constant 0 : i32
    return %c0_i32, %c0_i32_0 : i32, i32
  }
  func.func @transform_3(%arg0: i32) -> (i32, i32) {
    %c0_i32 = arith.constant 0 : i32
    %c0_i32_0 = arith.constant 0 : i32
    %c0_i32_1 = arith.constant 0 : i32
    return %c0_i32, %c0_i32_0 : i32, i32
  }
  func.func @transform_4(%arg0: i32) -> (i32, i32) {
    %c0_i32 = arith.constant 0 : i32
    %c0_i32_0 = arith.constant 0 : i32
    %c0_i32_1 = arith.constant 0 : i32
    return %c0_i32, %c0_i32_0 : i32, i32
  }
  func.func @transform_5(%arg0: i32) -> (i32, i32, i32) {
    %c0_i32 = arith.constant 0 : i32
    %c0_i32_0 = arith.constant 0 : i32
    %c0_i32_1 = arith.constant 0 : i32
    return %arg0, %c0_i32, %c0_i32_0 : i32, i32, i32
  }
}

</mosaic_0001>

<llo_original>
// kernel: tpu_custom_call.1
$region0: #{tpu_custom_call.1}
  #allocation0 [shape = 'u32[]', space=smem, size = 0x4, offset = 0x4, fixed_abs, tag = 'smem constant byte address 0x4 - core index']
  #allocation1 [shape = 'u32[72,128]{1,0:T(1,128)}', space=vmem, size = 0x9000, scoped, tag = 'internal scratch']
  %s0 = inlined_call_operand.hbm [shape: f32[2,8,32], index: 0, kind: input, shape index: {}]
  %s1 = inlined_call_operand.hbm [shape: f32[32,96], index: 1, kind: input, shape index: {}]
  %s2 = inlined_call_operand.vmem [shape: f32[1,96], index: 2, kind: input, shape index: {}]
  %s3 = inlined_call_operand.hbm [shape: f32[32,32], index: 3, kind: input, shape index: {}]
  %s4 = inlined_call_operand.vmem [shape: f32[1,32], index: 4, kind: input, shape index: {}]
  %s5 = inlined_call_operand.hbm [shape: f32[2,8,32], index: 5, kind: output, shape index: {}]
  %s6 = sld [smem:[#allocation0]]
  $region65: #{tpu_custom_call.1} parent=0
    _
  %s8 = ssub.s32 1, %s6
  %s9 = scalar_select 0, %s8, %s6
  $region1: #{tpu_custom_call.1} parent=0
    #allocation2 [shape = 'u8[8192]{0}', space=vmem, size = 0x2000, scoped, tag = 'input window, operand 0']
    #allocation3 [shape = 's32[2]{0}', space=sflag, size = 0x8, scoped, tag = 'scoped memory for tpu_custom_call.1']
    #allocation4 [shape = 's32[2]{0}', space=sflag, size = 0x8, scoped, tag = 'scoped memory for tpu_custom_call.1']
    #allocation5 [shape = 'u8[16384]{0}', space=vmem, size = 0x4000, scoped, tag = 'input window, operand 1, single buffered']
    #allocation6 [shape = 's32[1]{0}', space=sflag, size = 0x4, scoped, tag = 'scoped memory for tpu_custom_call.1']
    #allocation7 [shape = 'u8[16384]{0}', space=vmem, size = 0x4000, scoped, tag = 'input window, operand 3, single buffered']
    #allocation8 [shape = 'u8[8192]{0}', space=vmem, size = 0x2000, scoped, tag = 'output window, operand 0']
    %10 = vsyncpa [#allocation3], 0
    %s11 = scalar_lea.sflag [#allocation3], 1
    %12 = vsyncpa %s11, 0
    %13 = vsyncpa [#allocation6], 0
    %14 = vsyncpa [#allocation4], 0
    %s15 = scalar_lea.sflag [#allocation4], 1
    %16 = vsyncpa %s15, 0
    loop: start=0, step=1, limit=4
    $region2: #{tpu_custom_call.1} parent=1 // loop_pre_header
      _
    $region3: #{tpu_custom_call.1} parent=1 // loop_header
      %s18 = sphi 0, %s22
      %p19 = scmp.ge.s32.totalorder %s18, 4
      %s28 = sphi 0, %s30
      %s31 = sphi 0, %s28
      %s32 = sphi 0, %s31
      %s48 = sphi 0, %s32
      %s52 = sphi 0, %s52
      %s54 = sphi 0, %s52
      %s55 = sphi 0, %s54
      %s69 = sphi 0, %s55
      %s73 = sphi 0, %s73
      %s75 = sphi 0, %s73
      %s76 = sphi 0, %s75
      %s90 = sphi 0, %s76
      %s94 = sphi 0, %s94
      %s96 = sphi 0, %s94
      %s97 = sphi 0, %s96
      %s111 = sphi 0, %s97
      %s115 = sphi 0, %s115
      %s117 = sphi 0, %s115
      %s118 = sphi 0, %s117
      %s132 = sphi 0, %s118
      %s138 = sphi 0, %s140
      %s141 = sphi 0, %s138
      %s142 = sphi 0, %s141
      %s158 = sphi 0, %s142
    $region4: #{tpu_custom_call.1} parent=1 // loop_header_branch
      %21 = sbr.rel (%p19) target = $region8
    $region5: #{tpu_custom_call.1} parent=1 // loop_body
      %s23 = ssub.s32 %s18, 1
      %s24 = ssub.s32 %s18, 2
      %s25 = sadd.s32 %s18, 1
      %s26 = ssub.s32 %s18, %s25
      %p27 = scmp.eq.s32.totalorder %s26, 0
      %s29 = sadd.s32 %s28, 1
      %s30 = scalar_select %p27, %s28, %s29
      %p33 = pneg %p27
      %p34 = scmp.eq.s32.totalorder %s18, 1
      %p35 = por %p33, %p34
      %p36 = scmp.ne.s32.totalorder %s28, %s31
      %p37 = scmp.eq.s32.totalorder %s18, 0
      %p38 = por %p36, %p37
      %p39 = scmp.ne.s32.totalorder %s28, %s31
      %p40 = scmp.eq.s32.totalorder %s23, 1
      %p41 = por %p39, %p40
      %p42 = scmp.ne.s32.totalorder %s31, %s32
      %p43 = scmp.eq.s32.totalorder %s23, 0
      %p44 = por %p42, %p43
      %p45 = scmp.ne.s32.totalorder %s31, %s32
      %p46 = scmp.eq.s32.totalorder %s24, 1
      %p47 = por %p45, %p46
      %p49 = scmp.ne.s32.totalorder %s32, %s48
      %p50 = scmp.eq.s32.totalorder %s24, 0
      %p51 = por %p49, %p50
      %s53 = sadd.s32 %s52, 1
      %p56 = scmp.eq.s32.totalorder %s18, 1
      %p57 = scmp.ne.s32.totalorder %s52, %s54
      %p58 = scmp.eq.s32.totalorder %s18, 0
      %p59 = por %p57, %p58
      %p60 = scmp.ne.s32.totalorder %s52, %s54
      %p61 = scmp.eq.s32.totalorder %s23, 1
      %p62 = por %p60, %p61
      %p63 = scmp.ne.s32.totalorder %s54, %s55
      %p64 = scmp.eq.s32.totalorder %s23, 0
      %p65 = por %p63, %p64
      %p66 = scmp.ne.s32.totalorder %s54, %s55
      %p67 = scmp.eq.s32.totalorder %s24, 1
      %p68 = por %p66, %p67
      %p70 = scmp.ne.s32.totalorder %s55, %s69
      %p71 = scmp.eq.s32.totalorder %s24, 0
      %p72 = por %p70, %p71
      %s74 = sadd.s32 %s73, 1
      %p77 = scmp.eq.s32.totalorder %s18, 1
      %p78 = scmp.ne.s32.totalorder %s73, %s75
      %p79 = scmp.eq.s32.totalorder %s18, 0
      %p80 = por %p78, %p79
      %p81 = scmp.ne.s32.totalorder %s73, %s75
      %p82 = scmp.eq.s32.totalorder %s23, 1
      %p83 = por %p81, %p82
      %p84 = scmp.ne.s32.totalorder %s75, %s76
      %p85 = scmp.eq.s32.totalorder %s23, 0
      %p86 = por %p84, %p85
      %p87 = scmp.ne.s32.totalorder %s75, %s76
      %p88 = scmp.eq.s32.totalorder %s24, 1
      %p89 = por %p87, %p88
      %p91 = scmp.ne.s32.totalorder %s76, %s90
      %p92 = scmp.eq.s32.totalorder %s24, 0
      %p93 = por %p91, %p92
      %s95 = sadd.s32 %s94, 1
      %p98 = scmp.eq.s32.totalorder %s18, 1
      %p99 = scmp.ne.s32.totalorder %s94, %s96
      %p100 = scmp.eq.s32.totalorder %s18, 0
      %p101 = por %p99, %p100
      %p102 = scmp.ne.s32.totalorder %s94, %s96
      %p103 = scmp.eq.s32.totalorder %s23, 1
      %p104 = por %p102, %p103
      %p105 = scmp.ne.s32.totalorder %s96, %s97
      %p106 = scmp.eq.s32.totalorder %s23, 0
      %p107 = por %p105, %p106
      %p108 = scmp.ne.s32.totalorder %s96, %s97
      %p109 = scmp.eq.s32.totalorder %s24, 1
      %p110 = por %p108, %p109
      %p112 = scmp.ne.s32.totalorder %s97, %s111
      %p113 = scmp.eq.s32.totalorder %s24, 0
      %p114 = por %p112, %p113
      %s116 = sadd.s32 %s115, 1
      %p119 = scmp.eq.s32.totalorder %s18, 1
      %p120 = scmp.ne.s32.totalorder %s115, %s117
      %p121 = scmp.eq.s32.totalorder %s18, 0
      %p122 = por %p120, %p121
      %p123 = scmp.ne.s32.totalorder %s115, %s117
      %p124 = scmp.eq.s32.totalorder %s23, 1
      %p125 = por %p123, %p124
      %p126 = scmp.ne.s32.totalorder %s117, %s118
      %p127 = scmp.eq.s32.totalorder %s23, 0
      %p128 = por %p126, %p127
      %p129 = scmp.ne.s32.totalorder %s117, %s118
      %p130 = scmp.eq.s32.totalorder %s24, 1
      %p131 = por %p129, %p130
      %p133 = scmp.ne.s32.totalorder %s118, %s132
      %p134 = scmp.eq.s32.totalorder %s24, 0
      %p135 = por %p133, %p134
      %s136 = ssub.s32 %s18, %s25
      %p137 = scmp.eq.s32.totalorder %s136, 0
      %s139 = sadd.s32 %s138, 1
      %s140 = scalar_select %p137, %s138, %s139
      %p143 = pneg %p137
      %p144 = scmp.eq.s32.totalorder %s18, 1
      %p145 = por %p143, %p144
      %p146 = scmp.ne.s32.totalorder %s138, %s141
      %p147 = scmp.eq.s32.totalorder %s18, 0
      %p148 = por %p146, %p147
      %p149 = scmp.ne.s32.totalorder %s138, %s141
      %p150 = scmp.eq.s32.totalorder %s23, 1
      %p151 = por %p149, %p150
      %p152 = scmp.ne.s32.totalorder %s141, %s142
      %p153 = scmp.eq.s32.totalorder %s23, 0
      %p154 = por %p152, %p153
      %p155 = scmp.ne.s32.totalorder %s141, %s142
      %p156 = scmp.eq.s32.totalorder %s24, 1
      %p157 = por %p155, %p156
      %p159 = scmp.ne.s32.totalorder %s142, %s158
      %p160 = scmp.eq.s32.totalorder %s24, 0
      %p161 = por %p159, %p160
      %p162 = scmp.le.s32.totalorder 1, %s18
      %p163 = scmp.lt.s32.totalorder %s18, 3
      %p164 = pnand %p162, %p163
      %p165 = pneg %p164
      // Predicated region
      $region9: #{tpu_custom_call.1} parent=5 // pred_check
        _
      $region10: #{tpu_custom_call.1} parent=5 // pred_check_branch
        %167 = sbr.rel (%p164) target = $region12
      $region11: #{tpu_custom_call.1} parent=5 // pred_region
        %s168 = ssub.s32 %s18, 1
        // Predicated region
        $region13: #{tpu_custom_call.1} parent=11 // pred_check
          %p169 = pneg %p65
        $region14: #{tpu_custom_call.1} parent=11 // pred_check_branch
          %171 = sbr.rel (%p169) target = $region16
        $region15: #{tpu_custom_call.1} parent=11 // pred_region
          %173 = vsyncadd [#allocation6], 0
          %s174 = sshll.u32 %s1, 4
          %s175 = int_to_ptr.hbm [resolvable:$true] %s174
          %s176 = sshll.u32 [#allocation5], 4
          %s177 = int_to_ptr.vmem [resolvable:$true] %s176
          %182 = dma.hbm_to_vmem [thread:$0]  %s175, 512, %s177, [#allocation6], 128, 128, 8
        $region16: #{tpu_custom_call.1} parent=11 // pred_fallthru
          _
        // Predicated region
        $region17: #{tpu_custom_call.1} parent=11 // pred_check
          %p183 = pneg %p86
        $region18: #{tpu_custom_call.1} parent=11 // pred_check_branch
          %185 = sbr.rel (%p183) target = $region20
        $region19: #{tpu_custom_call.1} parent=11 // pred_region
          _
        $region20: #{tpu_custom_call.1} parent=11 // pred_fallthru
          _
        // Predicated region
        $region21: #{tpu_custom_call.1} parent=11 // pred_check
          %p186 = pneg %p107
        $region22: #{tpu_custom_call.1} parent=11 // pred_check_branch
          %188 = sbr.rel (%p186) target = $region24
        $region23: #{tpu_custom_call.1} parent=11 // pred_region
          %190 = vsyncadd [#allocation6], 0
          %s191 = sshll.u32 %s3, 4
          %s192 = int_to_ptr.hbm [resolvable:$true] %s191
          %s193 = sshll.u32 [#allocation7], 4
          %s194 = int_to_ptr.vmem [resolvable:$true] %s193
          %199 = dma.hbm_to_vmem [thread:$0]  %s192, 512, %s194, [#allocation6], 128, 128, 8
        $region24: #{tpu_custom_call.1} parent=11 // pred_fallthru
          _
        // Predicated region
        $region25: #{tpu_custom_call.1} parent=11 // pred_check
          %p200 = pneg %p128
        $region26: #{tpu_custom_call.1} parent=11 // pred_check_branch
          %202 = sbr.rel (%p200) target = $region28
        $region27: #{tpu_custom_call.1} parent=11 // pred_region
          _
        $region28: #{tpu_custom_call.1} parent=11 // pred_fallthru
          _
      $region12: #{tpu_custom_call.1} parent=5 // pred_fallthru
        _
      %p203 = scmp.lt.s32.totalorder %s18, 2
      // Predicated region
      $region29: #{tpu_custom_call.1} parent=5 // pred_check
        %p204 = pneg %p203
      $region30: #{tpu_custom_call.1} parent=5 // pred_check_branch
        %206 = sbr.rel (%p204) target = $region32
      $region31: #{tpu_custom_call.1} parent=5 // pred_region
        // Predicated region
        $region33: #{tpu_custom_call.1} parent=31 // pred_check
          %p207 = pneg %p38
        $region34: #{tpu_custom_call.1} parent=31 // pred_check_branch
          %209 = sbr.rel (%p207) target = $region36
        $region35: #{tpu_custom_call.1} parent=31 // pred_region
          %s210 = sand.u32 %s28, 1
          %s211 = scalar_lea.sflag [#allocation3], %s210
          %s212 = sand.u32 %s28, 1
          %s213 = smul.addr %s212, 8
          %s214 = scalar_lea.vmem [#allocation2], %s213
          %216 = vsyncadd %s211, 0
          %s217 = smul.addr %s18, 8
          %s218 = scalar_lea.hbm %s0, %s217
          %s220 = sshll.u32 %s218, 4
          %s221 = int_to_ptr.hbm [resolvable:$true] %s220
          %s222 = sshll.u32 %s214, 4
          %s223 = int_to_ptr.vmem [resolvable:$true] %s222
          %225 = dma.hbm_to_vmem [thread:$0]  %s221, 128, %s223, %s211
        $region36: #{tpu_custom_call.1} parent=31 // pred_fallthru
          _
      $region32: #{tpu_custom_call.1} parent=5 // pred_fallthru
        _
      %p226 = scmp.le.s32.totalorder 1, %s18
      %p227 = scmp.lt.s32.totalorder %s18, 3
      %p228 = pnand %p226, %p227
      %p229 = pneg %p228
      // Predicated region
      $region37: #{tpu_custom_call.1} parent=5 // pred_check
        _
      $region38: #{tpu_custom_call.1} parent=5 // pred_check_branch
        %231 = sbr.rel (%p228) target = $region40
      $region39: #{tpu_custom_call.1} parent=5 // pred_region
        %s232 = ssub.s32 %s18, 1
        %s233 = sand.u32 %s31, 1
        %s234 = scalar_lea.sflag [#allocation3], %s233
        %s235 = sand.u32 %s31, 1
        %s236 = smul.addr %s235, 8
        %s237 = scalar_lea.vmem [#allocation2], %s236
        // Predicated region
        $region41: #{tpu_custom_call.1} parent=39 // pred_check
          %p238 = pneg %p44
        $region42: #{tpu_custom_call.1} parent=39 // pred_check_branch
          %240 = sbr.rel (%p238) target = $region44
        $region43: #{tpu_custom_call.1} parent=39 // pred_region
          %242 = dma.done %s234, 128
        $region44: #{tpu_custom_call.1} parent=39 // pred_fallthru
          _
        // Predicated region
        $region45: #{tpu_custom_call.1} parent=39 // pred_check
          %p243 = pneg %p65
        $region46: #{tpu_custom_call.1} parent=39 // pred_check_branch
          %245 = sbr.rel (%p243) target = $region48
        $region47: #{tpu_custom_call.1} parent=39 // pred_region
          %247 = dma.done [#allocation6], 512
        $region48: #{tpu_custom_call.1} parent=39 // pred_fallthru
          _
        // Predicated region
        $region49: #{tpu_custom_call.1} parent=39 // pred_check
          %p248 = pneg %p107
        $region50: #{tpu_custom_call.1} parent=39 // pred_check_branch
          %250 = sbr.rel (%p248) target = $region52
        $region51: #{tpu_custom_call.1} parent=39 // pred_region
          %252 = dma.done [#allocation6], 512
        $region52: #{tpu_custom_call.1} parent=39 // pred_fallthru
          _
        %s253 = sand.u32 %s31, 1
        %s254 = scalar_lea.sflag [#allocation3], %s253
        %s255 = sand.u32 %s31, 1
        %s256 = smul.addr %s255, 8
        %s257 = scalar_lea.vmem [#allocation2], %s256
        %p258 = pneg %p44
        %p259 = pneg %p41
        %p260 = pneg %p65
        %p261 = pneg %p62
        %p262 = pneg %p86
        %p263 = pneg %p83
        %p264 = pneg %p107
        %p265 = pneg %p104
        %p266 = pneg %p128
        %p267 = pneg %p125
        %p268 = pneg %p154
        %p269 = pneg %p151
        %s270 = sand.u32 %s141, 1
        %s271 = scalar_lea.sflag [#allocation4], %s270
        %s272 = sand.u32 %s141, 1
        %s273 = smul.addr %s272, 8
        %s274 = scalar_lea.vmem [#allocation8], %s273
        %v275 = vld [vmem:[%s237] sm:$0xff]
        %v276 = vld [vmem:[#allocation5] sm:$0xff]
        %v277 = vld [vmem:[#allocation5 + $0x8] sm:$0xff]
        %v278 = vld [vmem:[#allocation5 + $0x10] sm:$0xff]
        %v279 = vld [vmem:[#allocation5 + $0x18] sm:$0xff]
        %v280 = vld [vmem:[%s2] sm:$0x1]
        %v282 = vperm.slane %v280, 0
        %vm284 = vcmask 261120
        %v286 = vsel %vm284, %v275, 0
        %288 = vmatpush.msra.mxu0 0.0
        %289 = vmatpush.msra.mxu0 0.0
        %290 = vmatpush.msra.mxu0 0.0
        %291 = vmatpush.msra.mxu0 0.0
        %292 = vmatpush.msra.mxu0 0.0
        %293 = vmatpush.msra.mxu0 0.0
        %294 = vmatpush.msra.mxu0 0.0
        %295 = vmatpush.msra.mxu0 0.0
        %296 = vmatpush.msra.mxu0 0.0
        %297 = vmatpush.msra.mxu0 0.0
        %298 = vmatpush.msra.mxu0 0.0
        %299 = vmatpush.msra.mxu0 0.0
        %300 = vmatpush.msra.mxu0 %v279
        %301 = vmatpush.msra.mxu0 %v278
        %302 = vmatpush.msra.mxu0 %v277
        %303 = vmatpush.msra.mxu0 %v276
        %304 = vmatmul.f32.gmra.mxu0 %v286
        %v305 = vpop.f32.mrf.mxu0
        %v306 = vadd.f32 %v282, %v305
        %307 = vdwg.mxu0
        %309 = vrot.lane.b32.xlu0 %v306, 96
        %v310 = vpop.permute.xlu0 %309
        %vm311 = vcmask 31744
        %v312 = vsel %vm311, %v306, 0
        %v314 = vsel %vm311, %v310, 0
        %316 = vmatpush.xpose.msra.mxu0 0.0
        %317 = vmatpush.xpose.msra.mxu0 0.0
        %318 = vmatpush.xpose.msra.mxu0 0.0
        %319 = vmatpush.xpose.msra.mxu0 0.0
        %320 = vmatpush.xpose.msra.mxu0 0.0
        %321 = vmatpush.xpose.msra.mxu0 0.0
        %322 = vmatpush.xpose.msra.mxu0 0.0
        %323 = vmatpush.xpose.msra.mxu0 0.0
        %324 = vmatpush.xpose.msra.mxu0 0.0
        %325 = vmatpush.xpose.msra.mxu0 0.0
        %326 = vmatpush.xpose.msra.mxu0 0.0
        %327 = vmatpush.xpose.msra.mxu0 0.0
        %328 = vmatpush.xpose.msra.mxu0 0.0
        %329 = vmatpush.xpose.msra.mxu0 0.0
        %330 = vmatpush.xpose.msra.mxu0 0.0
        %331 = vmatpush.xpose.msra.mxu0 %v314
        %332 = vmatmul.f32.gmra.mxu0 %v312
        %v333 = vpop.f32.mrf.mxu0
        %v334 = vadd.f32 0.0, %v333
        %335 = vdwg.mxu0
        %v336 = vmul.f32 %v334, 0.5
        %vm337 = vcmask 64512
        %v338 = vsel %vm337, %v336, -inf
        %339 = vmax.xlane.f32.xlu0 %v338
        %v340 = vpop.xlane.xlu0 %339
        %v341 = vsub.f32 %v336, %v340
        %v342 = vmul.f32 %v341, 1.442695
        %v343 = vpow.pop %v342
        %v344 = vsel %vm337, %v343, 0.0
        %345 = vadd.xlane.f32.xlu0 %v344
        %v346 = vpop.xlane.xlu0 %345
        %v347 = vrcp.pop %v346
        %v348 = vmul.f32 %v346, %v347
        %v349 = vsub.f32 1.0, %v348
        %v350 = vmul.f32 %v347, %v349
        %v351 = vadd.f32 %v347, %v350
        %vm352 = vweird.f32 %v346
        %vm353 = vweird.f32 %v347
        %vm354 = vmor %vm352, %vm353
        %v355 = vsel %vm354, %v347, %v351
        %v356 = vand.u32 2147483647, %v346
        %vm357 = vcmp.eq.f32.partialorder %v356, 8.507059e+37
        %v358 = vand.u32 %v346, 2147483648
        %v359 = vor.u32 1.1754944e-38, %v358
        %v360 = vsel %vm357, %v359, %v355
        %v361 = vmul.f32 %v343, %v360
        %362 = vrot.lane.b32.xlu0 %v306, 64
        %v363 = vpop.permute.xlu0 %362
        %v366 = vsel %vm337, %v361, 0
        %368 = vmatpush.msra.mxu0 0.0
        %369 = vmatpush.msra.mxu0 0.0
        %370 = vmatpush.msra.mxu0 0.0
        %371 = vmatpush.msra.mxu0 0.0
        %372 = vmatpush.msra.mxu0 0.0
        %373 = vmatpush.msra.mxu0 0.0
        %374 = vmatpush.msra.mxu0 0.0
        %375 = vmatpush.msra.mxu0 0.0
        %376 = vmatpush.msra.mxu0 0.0
        %377 = vmatpush.msra.mxu0 0.0
        %378 = vmatpush.msra.mxu0 0.0
        %379 = vmatpush.msra.mxu0 0.0
        %380 = vmatpush.msra.mxu0 0.0
        %381 = vmatpush.msra.mxu0 0.0
        %382 = vmatpush.msra.mxu0 0.0
        %383 = vmatpush.msra.mxu0 %v363
        %384 = vmatmul.f32.gmra.mxu0 %v366
        %v385 = vpop.f32.mrf.mxu0
        %v386 = vadd.f32 0.0, %v385
        %387 = vdwg.mxu0
        %388 = vrot.lane.b32.xlu0 %v306, 124
        %v389 = vpop.permute.xlu0 %388
        %390 = vrot.lane.b32.xlu0 %v306, 92
        %v391 = vpop.permute.xlu0 %390
        %v392 = vsel %vm311, %v389, 0
        %v394 = vsel %vm311, %v391, 0
        %396 = vmatpush.xpose.msra.mxu0 0.0
        %397 = vmatpush.xpose.msra.mxu0 0.0
        %398 = vmatpush.xpose.msra.mxu0 0.0
        %399 = vmatpush.xpose.msra.mxu0 0.0
        %400 = vmatpush.xpose.msra.mxu0 0.0
        %401 = vmatpush.xpose.msra.mxu0 0.0
        %402 = vmatpush.xpose.msra.mxu0 0.0
        %403 = vmatpush.xpose.msra.mxu0 0.0
        %404 = vmatpush.xpose.msra.mxu0 0.0
        %405 = vmatpush.xpose.msra.mxu0 0.0
        %406 = vmatpush.xpose.msra.mxu0 0.0
        %407 = vmatpush.xpose.msra.mxu0 0.0
        %408 = vmatpush.xpose.msra.mxu0 0.0
        %409 = vmatpush.xpose.msra.mxu0 0.0
        %410 = vmatpush.xpose.msra.mxu0 0.0
        %411 = vmatpush.xpose.msra.mxu0 %v394
        %412 = vmatmul.f32.gmra.mxu0 %v392
        %v413 = vpop.f32.mrf.mxu0
        %v414 = vadd.f32 0.0, %v413
        %415 = vdwg.mxu0
        %v416 = vmul.f32 %v414, 0.5
        %v417 = vsel %vm337, %v416, -inf
        %418 = vmax.xlane.f32.xlu0 %v417
        %v419 = vpop.xlane.xlu0 %418
        %v420 = vsub.f32 %v416, %v419
        %v421 = vmul.f32 %v420, 1.442695
        %v422 = vpow.pop %v421
        %v423 = vsel %vm337, %v422, 0.0
        %424 = vadd.xlane.f32.xlu0 %v423
        %v425 = vpop.xlane.xlu0 %424
        %v426 = vrcp.pop %v425
        %v427 = vmul.f32 %v425, %v426
        %v428 = vsub.f32 1.0, %v427
        %v429 = vmul.f32 %v426, %v428
        %v430 = vadd.f32 %v426, %v429
        %vm431 = vweird.f32 %v425
        %vm432 = vweird.f32 %v426
        %vm433 = vmor %vm431, %vm432
        %v434 = vsel %vm433, %v426, %v430
        %v435 = vand.u32 2147483647, %v425
        %vm436 = vcmp.eq.f32.partialorder %v435, 8.507059e+37
        %v437 = vand.u32 %v425, 2147483648
        %v438 = vor.u32 1.1754944e-38, %v437
        %v439 = vsel %vm436, %v438, %v434
        %v440 = vmul.f32 %v422, %v439
        %441 = vrot.lane.b32.xlu0 %v306, 60
        %v442 = vpop.permute.xlu0 %441
        %v445 = vsel %vm337, %v440, 0
        %447 = vmatpush.msra.mxu0 0.0
        %448 = vmatpush.msra.mxu0 0.0
        %449 = vmatpush.msra.mxu0 0.0
        %450 = vmatpush.msra.mxu0 0.0
        %451 = vmatpush.msra.mxu0 0.0
        %452 = vmatpush.msra.mxu0 0.0
        %453 = vmatpush.msra.mxu0 0.0
        %454 = vmatpush.msra.mxu0 0.0
        %455 = vmatpush.msra.mxu0 0.0
        %456 = vmatpush.msra.mxu0 0.0
        %457 = vmatpush.msra.mxu0 0.0
        %458 = vmatpush.msra.mxu0 0.0
        %459 = vmatpush.msra.mxu0 0.0
        %460 = vmatpush.msra.mxu0 0.0
        %461 = vmatpush.msra.mxu0 0.0
        %462 = vmatpush.msra.mxu0 %v442
        %463 = vmatmul.f32.gmra.mxu0 %v445
        %v464 = vpop.f32.mrf.mxu0
        %v465 = vadd.f32 0.0, %v464
        %466 = vdwg.mxu0
        %467 = vrot.lane.b32.xlu0 %v306, 120
        %v468 = vpop.permute.xlu0 %467
        %469 = vrot.lane.b32.xlu0 %v306, 88
        %v470 = vpop.permute.xlu0 %469
        %v471 = vsel %vm311, %v468, 0
        %v473 = vsel %vm311, %v470, 0
        %475 = vmatpush.xpose.msra.mxu0 0.0
        %476 = vmatpush.xpose.msra.mxu0 0.0
        %477 = vmatpush.xpose.msra.mxu0 0.0
        %478 = vmatpush.xpose.msra.mxu0 0.0
        %479 = vmatpush.xpose.msra.mxu0 0.0
        %480 = vmatpush.xpose.msra.mxu0 0.0
        %481 = vmatpush.xpose.msra.mxu0 0.0
        %482 = vmatpush.xpose.msra.mxu0 0.0
        %483 = vmatpush.xpose.msra.mxu0 0.0
        %484 = vmatpush.xpose.msra.mxu0 0.0
        %485 = vmatpush.xpose.msra.mxu0 0.0
        %486 = vmatpush.xpose.msra.mxu0 0.0
        %487 = vmatpush.xpose.msra.mxu0 0.0
        %488 = vmatpush.xpose.msra.mxu0 0.0
        %489 = vmatpush.xpose.msra.mxu0 0.0
        %490 = vmatpush.xpose.msra.mxu0 %v473
        %491 = vmatmul.f32.gmra.mxu0 %v471
        %v492 = vpop.f32.mrf.mxu0
        %v493 = vadd.f32 0.0, %v492
        %494 = vdwg.mxu0
        %v495 = vmul.f32 %v493, 0.5
        %v496 = vsel %vm337, %v495, -inf
        %497 = vmax.xlane.f32.xlu0 %v496
        %v498 = vpop.xlane.xlu0 %497
        %v499 = vsub.f32 %v495, %v498
        %v500 = vmul.f32 %v499, 1.442695
        %v501 = vpow.pop %v500
        %v502 = vsel %vm337, %v501, 0.0
        %503 = vadd.xlane.f32.xlu0 %v502
        %v504 = vpop.xlane.xlu0 %503
        %v505 = vrcp.pop %v504
        %v506 = vmul.f32 %v504, %v505
        %v507 = vsub.f32 1.0, %v506
        %v508 = vmul.f32 %v505, %v507
        %v509 = vadd.f32 %v505, %v508
        %vm510 = vweird.f32 %v504
        %vm511 = vweird.f32 %v505
        %vm512 = vmor %vm510, %vm511
        %v513 = vsel %vm512, %v505, %v509
        %v514 = vand.u32 2147483647, %v504
        %vm515 = vcmp.eq.f32.partialorder %v514, 8.507059e+37
        %v516 = vand.u32 %v504, 2147483648
        %v517 = vor.u32 1.1754944e-38, %v516
        %v518 = vsel %vm515, %v517, %v513
        %v519 = vmul.f32 %v501, %v518
        %520 = vrot.lane.b32.xlu0 %v306, 56
        %v521 = vpop.permute.xlu0 %520
        %v524 = vsel %vm337, %v519, 0
        %526 = vmatpush.msra.mxu0 0.0
        %527 = vmatpush.msra.mxu0 0.0
        %528 = vmatpush.msra.mxu0 0.0
        %529 = vmatpush.msra.mxu0 0.0
        %530 = vmatpush.msra.mxu0 0.0
        %531 = vmatpush.msra.mxu0 0.0
        %532 = vmatpush.msra.mxu0 0.0
        %533 = vmatpush.msra.mxu0 0.0
        %534 = vmatpush.msra.mxu0 0.0
        %535 = vmatpush.msra.mxu0 0.0
        %536 = vmatpush.msra.mxu0 0.0
        %537 = vmatpush.msra.mxu0 0.0
        %538 = vmatpush.msra.mxu0 0.0
        %539 = vmatpush.msra.mxu0 0.0
        %540 = vmatpush.msra.mxu0 0.0
        %541 = vmatpush.msra.mxu0 %v521
        %542 = vmatmul.f32.gmra.mxu0 %v524
        %v543 = vpop.f32.mrf.mxu0
        %v544 = vadd.f32 0.0, %v543
        %545 = vdwg.mxu0
        %546 = vrot.lane.b32.xlu0 %v306, 116
        %v547 = vpop.permute.xlu0 %546
        %548 = vrot.lane.b32.xlu0 %v306, 84
        %v549 = vpop.permute.xlu0 %548
        %v550 = vsel %vm311, %v547, 0
        %v552 = vsel %vm311, %v549, 0
        %554 = vmatpush.xpose.msra.mxu0 0.0
        %555 = vmatpush.xpose.msra.mxu0 0.0
        %556 = vmatpush.xpose.msra.mxu0 0.0
        %557 = vmatpush.xpose.msra.mxu0 0.0
        %558 = vmatpush.xpose.msra.mxu0 0.0
        %559 = vmatpush.xpose.msra.mxu0 0.0
        %560 = vmatpush.xpose.msra.mxu0 0.0
        %561 = vmatpush.xpose.msra.mxu0 0.0
        %562 = vmatpush.xpose.msra.mxu0 0.0
        %563 = vmatpush.xpose.msra.mxu0 0.0
        %564 = vmatpush.xpose.msra.mxu0 0.0
        %565 = vmatpush.xpose.msra.mxu0 0.0
        %566 = vmatpush.xpose.msra.mxu0 0.0
        %567 = vmatpush.xpose.msra.mxu0 0.0
        %568 = vmatpush.xpose.msra.mxu0 0.0
        %569 = vmatpush.xpose.msra.mxu0 %v552
        %570 = vmatmul.f32.gmra.mxu0 %v550
        %v571 = vpop.f32.mrf.mxu0
        %v572 = vadd.f32 0.0, %v571
        %573 = vdwg.mxu0
        %v574 = vmul.f32 %v572, 0.5
        %v575 = vsel %vm337, %v574, -inf
        %576 = vmax.xlane.f32.xlu0 %v575
        %v577 = vpop.xlane.xlu0 %576
        %v578 = vsub.f32 %v574, %v577
        %v579 = vmul.f32 %v578, 1.442695
        %v580 = vpow.pop %v579
        %v581 = vsel %vm337, %v580, 0.0
        %582 = vadd.xlane.f32.xlu0 %v581
        %v583 = vpop.xlane.xlu0 %582
        %v584 = vrcp.pop %v583
        %v585 = vmul.f32 %v583, %v584
        %v586 = vsub.f32 1.0, %v585
        %v587 = vmul.f32 %v584, %v586
        %v588 = vadd.f32 %v584, %v587
        %vm589 = vweird.f32 %v583
        %vm590 = vweird.f32 %v584
        %vm591 = vmor %vm589, %vm590
        %v592 = vsel %vm591, %v584, %v588
        %v593 = vand.u32 2147483647, %v583
        %vm594 = vcmp.eq.f32.partialorder %v593, 8.507059e+37
        %v595 = vand.u32 %v583, 2147483648
        %v596 = vor.u32 1.1754944e-38, %v595
        %v597 = vsel %vm594, %v596, %v592
        %v598 = vmul.f32 %v580, %v597
        %599 = vrot.lane.b32.xlu0 %v306, 52
        %v600 = vpop.permute.xlu0 %599
        %v603 = vsel %vm337, %v598, 0
        %605 = vmatpush.msra.mxu0 0.0
        %606 = vmatpush.msra.mxu0 0.0
        %607 = vmatpush.msra.mxu0 0.0
        %608 = vmatpush.msra.mxu0 0.0
        %609 = vmatpush.msra.mxu0 0.0
        %610 = vmatpush.msra.mxu0 0.0
        %611 = vmatpush.msra.mxu0 0.0
        %612 = vmatpush.msra.mxu0 0.0
        %613 = vmatpush.msra.mxu0 0.0
        %614 = vmatpush.msra.mxu0 0.0
        %615 = vmatpush.msra.mxu0 0.0
        %616 = vmatpush.msra.mxu0 0.0
        %617 = vmatpush.msra.mxu0 0.0
        %618 = vmatpush.msra.mxu0 0.0
        %619 = vmatpush.msra.mxu0 0.0
        %620 = vmatpush.msra.mxu0 %v600
        %621 = vmatmul.f32.gmra.mxu0 %v603
        %v622 = vpop.f32.mrf.mxu0
        %v623 = vadd.f32 0.0, %v622
        %624 = vdwg.mxu0
        %625 = vrot.lane.b32.xlu0 %v306, 112
        %v626 = vpop.permute.xlu0 %625
        %627 = vrot.lane.b32.xlu0 %v306, 80
        %v628 = vpop.permute.xlu0 %627
        %v629 = vsel %vm311, %v626, 0
        %v631 = vsel %vm311, %v628, 0
        %633 = vmatpush.xpose.msra.mxu0 0.0
        %634 = vmatpush.xpose.msra.mxu0 0.0
        %635 = vmatpush.xpose.msra.mxu0 0.0
        %636 = vmatpush.xpose.msra.mxu0 0.0
        %637 = vmatpush.xpose.msra.mxu0 0.0
        %638 = vmatpush.xpose.msra.mxu0 0.0
        %639 = vmatpush.xpose.msra.mxu0 0.0
        %640 = vmatpush.xpose.msra.mxu0 0.0
        %641 = vmatpush.xpose.msra.mxu0 0.0
        %642 = vmatpush.xpose.msra.mxu0 0.0
        %643 = vmatpush.xpose.msra.mxu0 0.0
        %644 = vmatpush.xpose.msra.mxu0 0.0
        %645 = vmatpush.xpose.msra.mxu0 0.0
        %646 = vmatpush.xpose.msra.mxu0 0.0
        %647 = vmatpush.xpose.msra.mxu0 0.0
        %648 = vmatpush.xpose.msra.mxu0 %v631
        %649 = vmatmul.f32.gmra.mxu0 %v629
        %v650 = vpop.f32.mrf.mxu0
        %v651 = vadd.f32 0.0, %v650
        %652 = vdwg.mxu0
        %v653 = vmul.f32 %v651, 0.5
        %v654 = vsel %vm337, %v653, -inf
        %655 = vmax.xlane.f32.xlu0 %v654
        %v656 = vpop.xlane.xlu0 %655
        %v657 = vsub.f32 %v653, %v656
        %v658 = vmul.f32 %v657, 1.442695
        %v659 = vpow.pop %v658
        %v660 = vsel %vm337, %v659, 0.0
        %661 = vadd.xlane.f32.xlu0 %v660
        %v662 = vpop.xlane.xlu0 %661
        %v663 = vrcp.pop %v662
        %v664 = vmul.f32 %v662, %v663
        %v665 = vsub.f32 1.0, %v664
        %v666 = vmul.f32 %v663, %v665
        %v667 = vadd.f32 %v663, %v666
        %vm668 = vweird.f32 %v662
        %vm669 = vweird.f32 %v663
        %vm670 = vmor %vm668, %vm669
        %v671 = vsel %vm670, %v663, %v667
        %v672 = vand.u32 2147483647, %v662
        %vm673 = vcmp.eq.f32.partialorder %v672, 8.507059e+37
        %v674 = vand.u32 %v662, 2147483648
        %v675 = vor.u32 1.1754944e-38, %v674
        %v676 = vsel %vm673, %v675, %v671
        %v677 = vmul.f32 %v659, %v676
        %678 = vrot.lane.b32.xlu0 %v306, 48
        %v679 = vpop.permute.xlu0 %678
        %v682 = vsel %vm337, %v677, 0
        %684 = vmatpush.msra.mxu0 0.0
        %685 = vmatpush.msra.mxu0 0.0
        %686 = vmatpush.msra.mxu0 0.0
        %687 = vmatpush.msra.mxu0 0.0
        %688 = vmatpush.msra.mxu0 0.0
        %689 = vmatpush.msra.mxu0 0.0
        %690 = vmatpush.msra.mxu0 0.0
        %691 = vmatpush.msra.mxu0 0.0
        %692 = vmatpush.msra.mxu0 0.0
        %693 = vmatpush.msra.mxu0 0.0
        %694 = vmatpush.msra.mxu0 0.0
        %695 = vmatpush.msra.mxu0 0.0
        %696 = vmatpush.msra.mxu0 0.0
        %697 = vmatpush.msra.mxu0 0.0
        %698 = vmatpush.msra.mxu0 0.0
        %699 = vmatpush.msra.mxu0 %v679
        %700 = vmatmul.f32.gmra.mxu0 %v682
        %v701 = vpop.f32.mrf.mxu0
        %v702 = vadd.f32 0.0, %v701
        %703 = vdwg.mxu0
        %704 = vrot.lane.b32.xlu0 %v306, 108
        %v705 = vpop.permute.xlu0 %704
        %706 = vrot.lane.b32.xlu0 %v306, 76
        %v707 = vpop.permute.xlu0 %706
        %v708 = vsel %vm311, %v705, 0
        %v710 = vsel %vm311, %v707, 0
        %712 = vmatpush.xpose.msra.mxu0 0.0
        %713 = vmatpush.xpose.msra.mxu0 0.0
        %714 = vmatpush.xpose.msra.mxu0 0.0
        %715 = vmatpush.xpose.msra.mxu0 0.0
        %716 = vmatpush.xpose.msra.mxu0 0.0
        %717 = vmatpush.xpose.msra.mxu0 0.0
        %718 = vmatpush.xpose.msra.mxu0 0.0
        %719 = vmatpush.xpose.msra.mxu0 0.0
        %720 = vmatpush.xpose.msra.mxu0 0.0
        %721 = vmatpush.xpose.msra.mxu0 0.0
        %722 = vmatpush.xpose.msra.mxu0 0.0
        %723 = vmatpush.xpose.msra.mxu0 0.0
        %724 = vmatpush.xpose.msra.mxu0 0.0
        %725 = vmatpush.xpose.msra.mxu0 0.0
        %726 = vmatpush.xpose.msra.mxu0 0.0
        %727 = vmatpush.xpose.msra.mxu0 %v710
        %728 = vmatmul.f32.gmra.mxu0 %v708
        %v729 = vpop.f32.mrf.mxu0
        %v730 = vadd.f32 0.0, %v729
        %731 = vdwg.mxu0
        %v732 = vmul.f32 %v730, 0.5
        %v733 = vsel %vm337, %v732, -inf
        %734 = vmax.xlane.f32.xlu0 %v733
        %v735 = vpop.xlane.xlu0 %734
        %v736 = vsub.f32 %v732, %v735
        %v737 = vmul.f32 %v736, 1.442695
        %v738 = vpow.pop %v737
        %v739 = vsel %vm337, %v738, 0.0
        %740 = vadd.xlane.f32.xlu0 %v739
        %v741 = vpop.xlane.xlu0 %740
        %v742 = vrcp.pop %v741
        %v743 = vmul.f32 %v741, %v742
        %v744 = vsub.f32 1.0, %v743
        %v745 = vmul.f32 %v742, %v744
        %v746 = vadd.f32 %v742, %v745
        %vm747 = vweird.f32 %v741
        %vm748 = vweird.f32 %v742
        %vm749 = vmor %vm747, %vm748
        %v750 = vsel %vm749, %v742, %v746
        %v751 = vand.u32 2147483647, %v741
        %vm752 = vcmp.eq.f32.partialorder %v751, 8.507059e+37
        %v753 = vand.u32 %v741, 2147483648
        %v754 = vor.u32 1.1754944e-38, %v753
        %v755 = vsel %vm752, %v754, %v750
        %v756 = vmul.f32 %v738, %v755
        %757 = vrot.lane.b32.xlu0 %v306, 44
        %v758 = vpop.permute.xlu0 %757
        %v761 = vsel %vm337, %v756, 0
        %763 = vmatpush.msra.mxu0 0.0
        %764 = vmatpush.msra.mxu0 0.0
        %765 = vmatpush.msra.mxu0 0.0
        %766 = vmatpush.msra.mxu0 0.0
        %767 = vmatpush.msra.mxu0 0.0
        %768 = vmatpush.msra.mxu0 0.0
        %769 = vmatpush.msra.mxu0 0.0
        %770 = vmatpush.msra.mxu0 0.0
        %771 = vmatpush.msra.mxu0 0.0
        %772 = vmatpush.msra.mxu0 0.0
        %773 = vmatpush.msra.mxu0 0.0
        %774 = vmatpush.msra.mxu0 0.0
        %775 = vmatpush.msra.mxu0 0.0
        %776 = vmatpush.msra.mxu0 0.0
        %777 = vmatpush.msra.mxu0 0.0
        %778 = vmatpush.msra.mxu0 %v758
        %779 = vmatmul.f32.gmra.mxu0 %v761
        %v780 = vpop.f32.mrf.mxu0
        %v781 = vadd.f32 0.0, %v780
        %782 = vdwg.mxu0
        %783 = vrot.lane.b32.xlu0 %v306, 104
        %v784 = vpop.permute.xlu0 %783
        %785 = vrot.lane.b32.xlu0 %v306, 72
        %v786 = vpop.permute.xlu0 %785
        %v787 = vsel %vm311, %v784, 0
        %v789 = vsel %vm311, %v786, 0
        %791 = vmatpush.xpose.msra.mxu0 0.0
        %792 = vmatpush.xpose.msra.mxu0 0.0
        %793 = vmatpush.xpose.msra.mxu0 0.0
        %794 = vmatpush.xpose.msra.mxu0 0.0
        %795 = vmatpush.xpose.msra.mxu0 0.0
        %796 = vmatpush.xpose.msra.mxu0 0.0
        %797 = vmatpush.xpose.msra.mxu0 0.0
        %798 = vmatpush.xpose.msra.mxu0 0.0
        %799 = vmatpush.xpose.msra.mxu0 0.0
        %800 = vmatpush.xpose.msra.mxu0 0.0
        %801 = vmatpush.xpose.msra.mxu0 0.0
        %802 = vmatpush.xpose.msra.mxu0 0.0
        %803 = vmatpush.xpose.msra.mxu0 0.0
        %804 = vmatpush.xpose.msra.mxu0 0.0
        %805 = vmatpush.xpose.msra.mxu0 0.0
        %806 = vmatpush.xpose.msra.mxu0 %v789
        %807 = vmatmul.f32.gmra.mxu0 %v787
        %v808 = vpop.f32.mrf.mxu0
        %v809 = vadd.f32 0.0, %v808
        %810 = vdwg.mxu0
        %v811 = vmul.f32 %v809, 0.5
        %v812 = vsel %vm337, %v811, -inf
        %813 = vmax.xlane.f32.xlu0 %v812
        %v814 = vpop.xlane.xlu0 %813
        %v815 = vsub.f32 %v811, %v814
        %v816 = vmul.f32 %v815, 1.442695
        %v817 = vpow.pop %v816
        %v818 = vsel %vm337, %v817, 0.0
        %819 = vadd.xlane.f32.xlu0 %v818
        %v820 = vpop.xlane.xlu0 %819
        %v821 = vrcp.pop %v820
        %v822 = vmul.f32 %v820, %v821
        %v823 = vsub.f32 1.0, %v822
        %v824 = vmul.f32 %v821, %v823
        %v825 = vadd.f32 %v821, %v824
        %vm826 = vweird.f32 %v820
        %vm827 = vweird.f32 %v821
        %vm828 = vmor %vm826, %vm827
        %v829 = vsel %vm828, %v821, %v825
        %v830 = vand.u32 2147483647, %v820
        %vm831 = vcmp.eq.f32.partialorder %v830, 8.507059e+37
        %v832 = vand.u32 %v820, 2147483648
        %v833 = vor.u32 1.1754944e-38, %v832
        %v834 = vsel %vm831, %v833, %v829
        %v835 = vmul.f32 %v817, %v834
        %836 = vrot.lane.b32.xlu0 %v306, 40
        %v837 = vpop.permute.xlu0 %836
        %v840 = vsel %vm337, %v835, 0
        %842 = vmatpush.msra.mxu0 0.0
        %843 = vmatpush.msra.mxu0 0.0
        %844 = vmatpush.msra.mxu0 0.0
        %845 = vmatpush.msra.mxu0 0.0
        %846 = vmatpush.msra.mxu0 0.0
        %847 = vmatpush.msra.mxu0 0.0
        %848 = vmatpush.msra.mxu0 0.0
        %849 = vmatpush.msra.mxu0 0.0
        %850 = vmatpush.msra.mxu0 0.0
        %851 = vmatpush.msra.mxu0 0.0
        %852 = vmatpush.msra.mxu0 0.0
        %853 = vmatpush.msra.mxu0 0.0
        %854 = vmatpush.msra.mxu0 0.0
        %855 = vmatpush.msra.mxu0 0.0
        %856 = vmatpush.msra.mxu0 0.0
        %857 = vmatpush.msra.mxu0 %v837
        %858 = vmatmul.f32.gmra.mxu0 %v840
        %v859 = vpop.f32.mrf.mxu0
        %v860 = vadd.f32 0.0, %v859
        %861 = vdwg.mxu0
        %862 = vrot.lane.b32.xlu0 %v306, 100
        %v863 = vpop.permute.xlu0 %862
        %864 = vrot.lane.b32.xlu0 %v306, 68
        %v865 = vpop.permute.xlu0 %864
        %v866 = vsel %vm311, %v863, 0
        %v868 = vsel %vm311, %v865, 0
        %870 = vmatpush.xpose.msra.mxu0 0.0
        %871 = vmatpush.xpose.msra.mxu0 0.0
        %872 = vmatpush.xpose.msra.mxu0 0.0
        %873 = vmatpush.xpose.msra.mxu0 0.0
        %874 = vmatpush.xpose.msra.mxu0 0.0
        %875 = vmatpush.xpose.msra.mxu0 0.0
        %876 = vmatpush.xpose.msra.mxu0 0.0
        %877 = vmatpush.xpose.msra.mxu0 0.0
        %878 = vmatpush.xpose.msra.mxu0 0.0
        %879 = vmatpush.xpose.msra.mxu0 0.0
        %880 = vmatpush.xpose.msra.mxu0 0.0
        %881 = vmatpush.xpose.msra.mxu0 0.0
        %882 = vmatpush.xpose.msra.mxu0 0.0
        %883 = vmatpush.xpose.msra.mxu0 0.0
        %884 = vmatpush.xpose.msra.mxu0 0.0
        %885 = vmatpush.xpose.msra.mxu0 %v868
        %886 = vmatmul.f32.gmra.mxu0 %v866
        %v887 = vpop.f32.mrf.mxu0
        %v888 = vadd.f32 0.0, %v887
        %889 = vdwg.mxu0
        %v890 = vmul.f32 %v888, 0.5
        %v891 = vsel %vm337, %v890, -inf
        %892 = vmax.xlane.f32.xlu0 %v891
        %v893 = vpop.xlane.xlu0 %892
        %v894 = vsub.f32 %v890, %v893
        %v895 = vmul.f32 %v894, 1.442695
        %v896 = vpow.pop %v895
        %v897 = vsel %vm337, %v896, 0.0
        %898 = vadd.xlane.f32.xlu0 %v897
        %v899 = vpop.xlane.xlu0 %898
        %v900 = vrcp.pop %v899
        %v901 = vmul.f32 %v899, %v900
        %v902 = vsub.f32 1.0, %v901
        %v903 = vmul.f32 %v900, %v902
        %v904 = vadd.f32 %v900, %v903
        %vm905 = vweird.f32 %v899
        %vm906 = vweird.f32 %v900
        %vm907 = vmor %vm905, %vm906
        %v908 = vsel %vm907, %v900, %v904
        %v909 = vand.u32 2147483647, %v899
        %vm910 = vcmp.eq.f32.partialorder %v909, 8.507059e+37
        %v911 = vand.u32 %v899, 2147483648
        %v912 = vor.u32 1.1754944e-38, %v911
        %v913 = vsel %vm910, %v912, %v908
        %v914 = vmul.f32 %v896, %v913
        %915 = vrot.lane.b32.xlu0 %v306, 36
        %v916 = vpop.permute.xlu0 %915
        %v919 = vsel %vm337, %v914, 0
        %921 = vmatpush.msra.mxu0 0.0
        %922 = vmatpush.msra.mxu0 0.0
        %923 = vmatpush.msra.mxu0 0.0
        %924 = vmatpush.msra.mxu0 0.0
        %925 = vmatpush.msra.mxu0 0.0
        %926 = vmatpush.msra.mxu0 0.0
        %927 = vmatpush.msra.mxu0 0.0
        %928 = vmatpush.msra.mxu0 0.0
        %929 = vmatpush.msra.mxu0 0.0
        %930 = vmatpush.msra.mxu0 0.0
        %931 = vmatpush.msra.mxu0 0.0
        %932 = vmatpush.msra.mxu0 0.0
        %933 = vmatpush.msra.mxu0 0.0
        %934 = vmatpush.msra.mxu0 0.0
        %935 = vmatpush.msra.mxu0 0.0
        %936 = vmatpush.msra.mxu0 %v916
        %937 = vmatmul.f32.gmra.mxu0 %v919
        %v938 = vpop.f32.mrf.mxu0
        %v939 = vadd.f32 0.0, %v938
        %940 = vdwg.mxu0
        %942 = vrot.lane.b32.xlu0 %v465, 4
        %v943 = vpop.permute.xlu0 %942
        %946 = vrot.lane.b32.xlu0 %v544, 8
        %v947 = vpop.permute.xlu0 %946
        %950 = vrot.lane.b32.xlu0 %v623, 12
        %v951 = vpop.permute.xlu0 %950
        %954 = vrot.lane.b32.xlu0 %v702, 16
        %v955 = vpop.permute.xlu0 %954
        %958 = vrot.lane.b32.xlu0 %v781, 20
        %v959 = vpop.permute.xlu0 %958
        %962 = vrot.lane.b32.xlu0 %v860, 24
        %v963 = vpop.permute.xlu0 %962
        %966 = vrot.lane.b32.xlu0 %v939, 28
        %v967 = vpop.permute.xlu0 %966
        %v969 = vsel %vm311, %v386, %v943
        %v970 = vsel %vm337, %v969, %v947
        %vm971 = vcmask 97280
        %v972 = vsel %vm971, %v970, %v951
        %vm973 = vcmask 130048
        %v974 = vsel %vm973, %v972, %v955
        %vm975 = vcmask 162816
        %v976 = vsel %vm975, %v974, %v959
        %vm977 = vcmask 195584
        %v978 = vsel %vm977, %v976, %v963
        %vm979 = vcmask 228352
        %v980 = vsel %vm979, %v978, %v967
        %v981 = vld [vmem:[#allocation7] sm:$0xff]
        %v982 = vld [vmem:[#allocation7 + $0x8] sm:$0xff]
        %v983 = vld [vmem:[#allocation7 + $0x10] sm:$0xff]
        %v984 = vld [vmem:[#allocation7 + $0x18] sm:$0xff]
        %v985 = vld [vmem:[%s4] sm:$0x1]
        %v987 = vperm.slane %v985, 0
        %v990 = vsel %vm284, %v980, 0
        %992 = vmatpush.msra.mxu0 0.0
        %993 = vmatpush.msra.mxu0 0.0
        %994 = vmatpush.msra.mxu0 0.0
        %995 = vmatpush.msra.mxu0 0.0
        %996 = vmatpush.msra.mxu0 0.0
        %997 = vmatpush.msra.mxu0 0.0
        %998 = vmatpush.msra.mxu0 0.0
        %999 = vmatpush.msra.mxu0 0.0
        %1000 = vmatpush.msra.mxu0 0.0
        %1001 = vmatpush.msra.mxu0 0.0
        %1002 = vmatpush.msra.mxu0 0.0
        %1003 = vmatpush.msra.mxu0 0.0
        %1004 = vmatpush.msra.mxu0 %v984
        %1005 = vmatpush.msra.mxu0 %v983
        %1006 = vmatpush.msra.mxu0 %v982
        %1007 = vmatpush.msra.mxu0 %v981
        %1008 = vmatmul.f32.gmra.mxu0 %v990
        %v1009 = vpop.f32.mrf.mxu0
        %v1010 = vadd.f32 %v987, %v1009
        %1011 = vdwg.mxu0
        %1012 = vst.msk [vmem:[%s274] sm:$0xff] %vm284, %v1010
        %s1013 = sand.u32 %s141, 1
        %s1014 = scalar_lea.sflag [#allocation4], %s1013
        %s1015 = sand.u32 %s141, 1
        %s1016 = smul.addr %s1015, 8
        %s1017 = scalar_lea.vmem [#allocation8], %s1016
        // Predicated region
        $region53: #{tpu_custom_call.1} parent=39 // pred_check
          %p1018 = pneg %p151
        $region54: #{tpu_custom_call.1} parent=39 // pred_check_branch
          %1020 = sbr.rel (%p1018) target = $region56
        $region55: #{tpu_custom_call.1} parent=39 // pred_region
          %1022 = vsyncadd %s1014, 0
          %s1023 = smul.addr %s23, 8
          %s1024 = scalar_lea.hbm %s5, %s1023
          %s1026 = sshll.u32 %s1017, 4
          %s1027 = int_to_ptr.vmem [resolvable:$true] %s1026
          %s1028 = sshll.u32 %s1024, 4
          %s1029 = int_to_ptr.hbm [resolvable:$true] %s1028
          %1031 = dma.vmem_to_hbm [thread:$0]  %s1027, 128, %s1029, %s1014
        $region56: #{tpu_custom_call.1} parent=39 // pred_fallthru
          _
      $region40: #{tpu_custom_call.1} parent=5 // pred_fallthru
        _
      %p1032 = scmp.le.s32.totalorder 2, %s18
      // Predicated region
      $region57: #{tpu_custom_call.1} parent=5 // pred_check
        %p1033 = pneg %p1032
      $region58: #{tpu_custom_call.1} parent=5 // pred_check_branch
        %1035 = sbr.rel (%p1033) target = $region60
      $region59: #{tpu_custom_call.1} parent=5 // pred_region
        %s1036 = ssub.s32 %s18, 2
        // Predicated region
        $region61: #{tpu_custom_call.1} parent=59 // pred_check
          %p1037 = pneg %p157
        $region62: #{tpu_custom_call.1} parent=59 // pred_check_branch
          %1039 = sbr.rel (%p1037) target = $region64
        $region63: #{tpu_custom_call.1} parent=59 // pred_region
          %s1040 = sand.u32 %s142, 1
          %s1041 = scalar_lea.sflag [#allocation4], %s1040
          %s1042 = sand.u32 %s142, 1
          %s1043 = smul.addr %s1042, 8
          %s1044 = scalar_lea.vmem [#allocation8], %s1043
          %1046 = dma.done %s1041, 128
        $region64: #{tpu_custom_call.1} parent=59 // pred_fallthru
          _
      $region60: #{tpu_custom_call.1} parent=5 // pred_fallthru
        _
    $region6: #{tpu_custom_call.1} parent=1 // loop_footer
      %s22 = sadd.s32 1, %s18
    $region7: #{tpu_custom_call.1} parent=1 // loop_footer_branch
      %17 = sbr.rel target = $region3
    $region8: #{tpu_custom_call.1} parent=1 // loop_exit
      _
    %1047 = vsyncpa [#allocation3], 1
    %s1048 = scalar_lea.sflag [#allocation3], 1
    %1049 = vsyncpa %s1048, 1
    %1050 = vsyncpa [#allocation6], 1
    %1051 = vsyncpa [#allocation4], 1
    %s1052 = scalar_lea.sflag [#allocation4], 1
    %1053 = vsyncpa %s1052, 1

</llo_original>
